<compile_context>
chip_gen: v6e
topology: v6e:2x2x1
jax: 0.10.0
libtpu: 0.0.40
codegen_flags: <defaults>
</compile_context>

<pallas_src>
import functools

import jax
import jax.numpy as jnp
from jax.experimental import pallas as pl
from jax.experimental.pallas import tpu as pltpu


def _round_up(x: int, m: int) -> int:
    return ((x + m - 1) // m) * m


def _vmem_capacity_bytes() -> int:
    """Per-core VMEM capacity; conservative (v7x-sized) fallback if unavailable."""
    try:
        info = pltpu.get_tpu_info()
        for attr in ("vmem_capacity_bytes", "vmem_size_bytes", "vmem_bytes"):
            v = getattr(info, attr, None)
            if v:
                return int(v)
    except Exception:
        pass
    return 64 * 1024 * 1024


def _choose_row_tile(h: int, w: int, k: int, itemsize: int,
                     budget: int, min_tiles: int) -> int:
    """Rows per output tile.

    Multiple of 8 (TPU sublane), capped so the double-buffered (k, tile_h, w)
    guide block fits `budget` bytes, capped at 512 rows (past the HBM roofline),
    and small enough to give at least `min_tiles` row tiles so both TensorCores
    of dual-core chips have work even when B == 1.  A partial last tile is
    allowed (grid uses pl.cdiv), so tile_h need not divide H.
    """
    if h <= 8:
        return h
    cap_budget = max(8, (budget // max(1, 2 * k * w * itemsize)) // 8 * 8)
    if min_tiles > 1:
        cap_tiles = max(8, (-(-h // min_tiles)) // 8 * 8)
    else:
        cap_tiles = h
    tile = min(_round_up(h, 8), cap_budget, cap_tiles, 512)
    tile = max(8, (tile // 8) * 8)
    if tile >= h:
        return h            # single full-height tile; full-dim block is always legal
    return tile


def _cspn_kernel(gw_ref, hn_ref, h0_ref, out_ref, acc_ref, *,
                 k, dil, ty_mid, tx_mid, tile_h, width):
    """One (batch, row-tile, tap-row) grid step.

    gw_ref : (1, k, tile_h, W)   guide planes for taps ty*k .. ty*k + k - 1
    hn_ref : (1, Hs, Ws)         zero-padded source slab (resident per batch)
    h0_ref : (1, tile_h, W)      centre-tap source (unshifted)
    out_ref: (1, tile_h, W)      output tile (written on the last tap row)
    acc_ref: (tile_h, W) f32     resident accumulator scratch
    """
    h = pl.program_id(1)
    ty = pl.program_id(2)

    @pl.when(ty == 0)
    def _init():
        acc_ref[...] = jnp.zeros_like(acc_ref)

    # Dynamic sublane offset into the padded source slab: done ONCE per step;
    # the k per-tap column shifts below are static slices of this band.
    base = h * tile_h
    if tile_h % 8 == 0:
        base = pl.multiple_of(base, 8)
    row0 = base + ty * dil
    band = hn_ref[0, pl.ds(row0, tile_h), :].astype(jnp.float32)

    # Accumulate the k column taps in a value; one acc_ref load/store per step.
    acc = acc_ref[...]
    for tx in range(k):
        gw = gw_ref[0, tx].astype(jnp.float32)
        src = band[:, tx * dil: tx * dil + width]
        if tx == tx_mid:
            # Centre tap reads input0 (unshifted) instead of the padded input.
            src = jnp.where(ty == ty_mid, h0_ref[0].astype(jnp.float32), src)
        acc = acc + gw * src

    @pl.when(ty != k - 1)
    def _carry():
        acc_ref[...] = acc

    @pl.when(ty == k - 1)
    def _finish():
        out_ref[0] = acc.astype(out_ref.dtype)


def cspn_forward(guide, inp, inp0, kernel_size, dilation=1, padding=1, stride=1):
    """Pallas equivalent of CSPNAccelerate.forward(kernel=guide, input=inp, input0=inp0)."""
    k, d, p = kernel_size, dilation, padding
    if stride != 1:
        # TODO(synk): strided unfold changes the output geometry; PENet never uses it.
        raise NotImplementedError("CSPNAccelerate Pallas kernel supports stride == 1 only")
    B, K2, H, W = guide.shape
    assert K2 == k * k, (K2, k)
    assert inp.shape == (B, 1, H, W) and inp0.shape == (B, 1, H, W)
    # Required so unfold output length == H*W (matches the module's reshape).
    assert 2 * p == d * (k - 1), "need 2*padding == dilation*(kernel_size-1)"

    out_dtype = jnp.result_type(guide.dtype, inp.dtype, inp0.dtype)
    itemsize = max(jnp.dtype(a.dtype).itemsize for a in (guide, inp, inp0))

    halo = d * (k - 1)
    ws = _round_up(W + halo, 128)

    # Per-generation VMEM sizing: 128 MiB on v5e/v6e, 64 MiB on v7x.
    vmem_cap = _vmem_capacity_bytes()
    vmem_limit = max(32 << 20, (vmem_cap * 3) // 4)

    # Budget the double-buffered guide block with what is left after the
    # resident source slab (upper bound on its rows: tile_h <= 512) + slack.
    slab_rows_bound = _round_up(H, 8) + 512 + halo
    slab_bytes = slab_rows_bound * ws * jnp.dtype(inp.dtype).itemsize
    guide_budget = max(2 << 20, vmem_limit - 2 * slab_bytes - (8 << 20))

    min_tiles = 2 if (B == 1 and H > 8) else 1      # keep both TCs busy on v7x
    tile_h = _choose_row_tile(H, W, k, itemsize, guide_budget, min_tiles)
    n_h = pl.cdiv(H, tile_h)

    # Zero-padded source slab: carries the unfold zero padding (p on top/left)
    # plus halo/overrun rows so every shifted tap read of every (possibly
    # partial) row tile is an in-bounds slice of one resident VMEM slab.
    hs = _round_up(n_h * tile_h + halo, 8)
    hn = jnp.pad(inp[:, 0], ((0, 0), (p, hs - H - p), (p, ws - W - p)))
    h0 = inp0[:, 0]            # centre-tap source, unpadded
    gw = guide                 # dominant stream, streamed unpadded from HBM

    mid = (K2 - 1) // 2
    kernel_fn = functools.partial(
        _cspn_kernel, k=k, dil=d, ty_mid=mid // k, tx_mid=mid % k,
        tile_h=tile_h, width=W)

    flops = 2 * B * K2 * H * W
    bytes_accessed = int(guide.size * jnp.dtype(guide.dtype).itemsize
                         + hn.size * jnp.dtype(hn.dtype).itemsize
                         + h0.size * jnp.dtype(h0.dtype).itemsize
                         + B * H * W * jnp.dtype(out_dtype).itemsize)

    out = pl.pallas_call(
        kernel_fn,
        out_shape=jax.ShapeDtypeStruct((B, H, W), out_dtype),
        grid_spec=pltpu.PrefetchScalarGridSpec(
            num_scalar_prefetch=0,
            grid=(B, n_h, k),
            in_specs=[
                # k guide planes per step (lane dim = full W, row tile multiple of 8
                # with a partial last tile) -> streamed back-to-back, no pad copy.
                pl.BlockSpec((1, k, tile_h, W), lambda b, h, ty: (b, ty, h, 0)),
                # full padded source slab, resident per batch (re-DMA'd only on b change).
                pl.BlockSpec((1, hs, ws), lambda b, h, ty: (b, 0, 0)),
                # centre-tap source, resident per (batch, row tile).
                pl.BlockSpec((1, tile_h, W), lambda b, h, ty: (b, h, 0)),
            ],
            # Output block constant across the tap axis -> resident accumulator tile.
            out_specs=pl.BlockSpec((1, tile_h, W), lambda b, h, ty: (b, h, 0)),
            scratch_shapes=[pltpu.VMEM((tile_h, W), jnp.float32)],
        ),
        compiler_params=pltpu.CompilerParams(
            dimension_semantics=("parallel", "parallel", "arbitrary"),
            vmem_limit_bytes=int(vmem_limit),
        ),
        cost_estimate=pl.CostEstimate(flops=flops, transcendentals=0,
                                      bytes_accessed=bytes_accessed),
    )(gw, hn, h0)

    return out[:, None]        # (B, 1, H, W)


def cspn_reference(guide, inp, inp0, kernel_size, dilation=1, padding=1, stride=1):
    """Pure-JAX reference reproducing CSPNAccelerate.forward (F.unfold semantics)."""
    assert stride == 1
    k, d, p = kernel_size, dilation, padding
    B, _, H, W = inp.shape
    xpad = jnp.pad(inp[:, 0], ((0, 0), (p, p), (p, p)))
    mid = (k * k - 1) // 2
    taps = []
    for t in range(k * k):
        ty, tx = divmod(t, k)
        if t == mid:
            taps.append(inp0[:, 0])                                 # centre-tap swap
        else:
            taps.append(xpad[:, ty * d: ty * d + H, tx * d: tx * d + W])
    im2col = jnp.stack(taps, axis=1)                                # (B, k*k, H, W)
    out = jnp.sum(guide.reshape(B, k * k, H, W) * im2col, axis=1)
    return out[:, None]


if __name__ == "__main__":
    key = jax.random.PRNGKey(0)

    # Config 1: PENet's common CSPN(kernel_size=3, padding=1), B=2, 16x16.
    B, H, W, k, d, p = 2, 16, 16, 3, 1, 1
    kg, kn, k0, key = jax.random.split(key, 4)
    guide = jax.random.normal(kg, (B, k * k, H, W), dtype=jnp.float32)
    inp = jax.random.normal(kn, (B, 1, H, W), dtype=jnp.float32)
    inp0 = jax.random.normal(k0, (B, 1, H, W), dtype=jnp.float32)

    out = jax.block_until_ready(cspn_forward(guide, inp, inp0, k, d, p, 1))
    ref = cspn_reference(guide, inp, inp0, k, d, p, 1)
    assert out.shape == (B, 1, H, W), out.shape
    assert jnp.allclose(out, ref, atol=1e-5, rtol=1e-5), "mismatch vs reference (k=3)"

    # Config 2: kernel_size=5, padding=2, B=1 with a non-multiple-of-8 height
    # (exercises partial row tiles, the >=2-tile split, and a non-centre grid).
    B, H, W, k, d, p = 1, 20, 40, 5, 1, 2
    kg, kn, k0, key = jax.random.split(key, 4)
    guide = jax.random.normal(kg, (B, k * k, H, W), dtype=jnp.float32)
    inp = jax.random.normal(kn, (B, 1, H, W), dtype=jnp.float32)
    inp0 = jax.random.normal(k0, (B, 1, H, W), dtype=jnp.float32)

    out = jax.block_until_ready(cspn_forward(guide, inp, inp0, k, d, p, 1))
    ref = cspn_reference(guide, inp, inp0, k, d, p, 1)
    assert out.shape == (B, 1, H, W), out.shape
    assert jnp.allclose(out, ref, atol=1e-5, rtol=1e-5), "mismatch vs reference (k=5)"

    print("KERNEL_OK")
</pallas_src>

<mosaic_0001>
module attributes {stable_mosaic.version = 11 : i64} {
  func.func @_cspn_kernel(%arg0: i32, %arg1: i32, %arg2: i32, %arg3: memref<1x3x16x16xf32, #tpu.memory_space<vmem>>, %arg4: memref<1x24x128xf32, #tpu.memory_space<vmem>>, %arg5: memref<1x16x16xf32, #tpu.memory_space<vmem>>, %arg6: memref<1x16x16xf32, #tpu.memory_space<vmem>>, %arg7: memref<16x16xf32, #tpu.memory_space<vmem>>) attributes {dimension_semantics = [#tpu.dimension_semantics<parallel>, #tpu.dimension_semantics<parallel>, #tpu.dimension_semantics<arbitrary>], iteration_bounds = array<i64: 2, 1, 3>, scalar_prefetch = 0 : i64, scratch_operands = 1 : i64, tpu.core_type = #tpu.core_type<tc>, window_params = [{transform_indices = @transform_0, window_bounds = array<i64: 1, 3, 16, 16>}, {transform_indices = @transform_1, window_bounds = array<i64: 1, 24, 128>}, {transform_indices = @transform_2, window_bounds = array<i64: 1, 16, 16>}, {transform_indices = @transform_3, window_bounds = array<i64: 1, 16, 16>}]} {
    %c0_i32 = arith.constant 0 : i32
    %0 = arith.cmpi eq, %arg2, %c0_i32 : i32
    %1 = arith.extui %0 : i1 to i32
    %c0_i32_0 = arith.constant 0 : i32
    %2 = arith.cmpi ne, %1, %c0_i32_0 : i32
    scf.if %2 {
      %cst = arith.constant 0.000000e+00 : f32
      %36 = vector.broadcast %cst : f32 to vector<16x16xf32>
      %c0_21 = arith.constant 0 : index
      %c0_22 = arith.constant 0 : index
      %37 = vector.load %arg7[%c0_21, %c0_22] : memref<16x16xf32, #tpu.memory_space<vmem>>, vector<16x16xf32>
      tpu.vector_store %arg7[%c0_21, %c0_22], %36 {strides = array<i32>} : memref<16x16xf32, #tpu.memory_space<vmem>>, vector<16x16xf32>,
    } else {
    }
    %c16_i32 = arith.constant 16 : i32
    %3 = arith.muli %arg1, %c16_i32 : i32
    %4 = tpu.assume_multiple %3, 8 : i32
    %c1_i32 = arith.constant 1 : i32
    %5 = arith.muli %arg2, %c1_i32 : i32
    %6 = arith.addi %4, %5 : i32
    %c0 = arith.constant 0 : index
    %7 = arith.index_cast %6 : i32 to index
    %c0_1 = arith.constant 0 : index
    %8 = vector.load %arg4[%c0, %7, %c0_1] : memref<1x24x128xf32, #tpu.memory_space<vmem>>, vector<1x16x128xf32>
    %9 = vector.shape_cast %8 : vector<1x16x128xf32> to vector<16x128xf32>
    %c0_2 = arith.constant 0 : index
    %c0_3 = arith.constant 0 : index
    %10 = vector.load %arg7[%c0_2, %c0_3] : memref<16x16xf32, #tpu.memory_space<vmem>>, vector<16x16xf32>
    %c0_4 = arith.constant 0 : index
    %c0_5 = arith.constant 0 : index
    %c0_6 = arith.constant 0 : index
    %c0_7 = arith.constant 0 : index
    %11 = vector.load %arg3[%c0_4, %c0_5, %c0_6, %c0_7] : memref<1x3x16x16xf32, #tpu.memory_space<vmem>>, vector<1x1x16x16xf32>
    %12 = vector.shape_cast %11 : vector<1x1x16x16xf32> to vector<16x16xf32>
    %13 = vector.extract_strided_slice %9 {offsets = [0, 0], sizes = [16, 16], strides = [1, 1]} : vector<16x128xf32> to vector<16x16xf32>
    %14 = arith.mulf %12, %13 : vector<16x16xf32>
    %15 = arith.addf %10, %14 : vector<16x16xf32>
    %c0_8 = arith.constant 0 : index
    %c1 = arith.constant 1 : index
    %c0_9 = arith.constant 0 : index
    %c0_10 = arith.constant 0 : index
    %16 = vector.load %arg3[%c0_8, %c1, %c0_9, %c0_10] : memref<1x3x16x16xf32, #tpu.memory_space<vmem>>, vector<1x1x16x16xf32>
    %17 = vector.shape_cast %16 : vector<1x1x16x16xf32> to vector<16x16xf32>
    %18 = vector.extract_strided_slice %9 {offsets = [0, 1], sizes = [16, 16], strides = [1, 1]} : vector<16x128xf32> to vector<16x16xf32>
    %c1_i32_11 = arith.constant 1 : i32
    %19 = arith.cmpi eq, %arg2, %c1_i32_11 : i32
    %c0_12 = arith.constant 0 : index
    %c0_13 = arith.constant 0 : index
    %c0_14 = arith.constant 0 : index
    %20 = vector.load %arg5[%c0_12, %c0_13, %c0_14] : memref<1x16x16xf32, #tpu.memory_space<vmem>>, vector<1x16x16xf32>
    %21 = vector.shape_cast %20 : vector<1x16x16xf32> to vector<16x16xf32>
    %22 = arith.select %19, %21, %18 : vector<16x16xf32>
    %23 = arith.mulf %17, %22 : vector<16x16xf32>
    %24 = arith.addf %15, %23 : vector<16x16xf32>
    %c0_15 = arith.constant 0 : index
    %c2 = arith.constant 2 : index
    %c0_16 = arith.constant 0 : index
    %c0_17 = arith.constant 0 : index
    %25 = vector.load %arg3[%c0_15, %c2, %c0_16, %c0_17] : memref<1x3x16x16xf32, #tpu.memory_space<vmem>>, vector<1x1x16x16xf32>
    %26 = vector.shape_cast %25 : vector<1x1x16x16xf32> to vector<16x16xf32>
    %27 = vector.extract_strided_slice %9 {offsets = [0, 2], sizes = [16, 16], strides = [1, 1]} : vector<16x128xf32> to vector<16x16xf32>
    %28 = arith.mulf %26, %27 : vector<16x16xf32>
    %29 = arith.addf %24, %28 : vector<16x16xf32>
    %c2_i32 = arith.constant 2 : i32
    %30 = arith.cmpi ne, %arg2, %c2_i32 : i32
    %31 = arith.extui %30 : i1 to i32
    %c0_i32_18 = arith.constant 0 : i32
    %32 = arith.cmpi ne, %31, %c0_i32_18 : i32
    scf.if %32 {
      %c0_21 = arith.constant 0 : index
      %c0_22 = arith.constant 0 : index
      %36 = vector.load %arg7[%c0_21, %c0_22] : memref<16x16xf32, #tpu.memory_space<vmem>>, vector<16x16xf32>
      tpu.vector_store %arg7[%c0_21, %c0_22], %29 {strides = array<i32>} : memref<16x16xf32, #tpu.memory_space<vmem>>, vector<16x16xf32>,
    } else {
    }
    %c2_i32_19 = arith.constant 2 : i32
    %33 = arith.cmpi eq, %arg2, %c2_i32_19 : i32
    %34 = arith.extui %33 : i1 to i32
    %c0_i32_20 = arith.constant 0 : i32
    %35 = arith.cmpi ne, %34, %c0_i32_20 : i32
    scf.if %35 {
      %c0_21 = arith.constant 0 : index
      %c0_22 = arith.constant 0 : index
      %c0_23 = arith.constant 0 : index
      %36 = vector.load %arg6[%c0_21, %c0_22, %c0_23] : memref<1x16x16xf32, #tpu.memory_space<vmem>>, vector<1x16x16xf32>
      %37 = vector.shape_cast %36 : vector<1x16x16xf32> to vector<16x16xf32>
      %38 = vector.shape_cast %29 : vector<16x16xf32> to vector<1x16x16xf32>
      tpu.vector_store %arg6[%c0_21, %c0_22, %c0_23], %38 {strides = array<i32>} : memref<1x16x16xf32, #tpu.memory_space<vmem>>, vector<1x16x16xf32>,
    } else {
    }
    return
  }
  func.func @transform_0(%arg0: i32, %arg1: i32, %arg2: i32) -> (i32, i32, i32, i32) {
    %c0_i32 = arith.constant 0 : i32
    %c0_i32_0 = arith.constant 0 : i32
    return %arg0, %arg2, %arg1, %c0_i32 : i32, i32, i32, i32
  }
  func.func @transform_1(%arg0: i32, %arg1: i32, %arg2: i32) -> (i32, i32, i32) {
    %c0_i32 = arith.constant 0 : i32
    %c0_i32_0 = arith.constant 0 : i32
    %c0_i32_1 = arith.constant 0 : i32
    return %arg0, %c0_i32, %c0_i32_0 : i32, i32, i32
  }
  func.func @transform_2(%arg0: i32, %arg1: i32, %arg2: i32) -> (i32, i32, i32) {
    %c0_i32 = arith.constant 0 : i32
    %c0_i32_0 = arith.constant 0 : i32
    return %arg0, %arg1, %c0_i32 : i32, i32, i32
  }
  func.func @transform_3(%arg0: i32, %arg1: i32, %arg2: i32) -> (i32, i32, i32) {
    %c0_i32 = arith.constant 0 : i32
    %c0_i32_0 = arith.constant 0 : i32
    return %arg0, %arg1, %c0_i32 : i32, i32, i32
  }
}

</mosaic_0001>

<llo_original>
// kernel: tpu_custom_call.1
$region0: #{tpu_custom_call.1}
  #allocation0 [shape = 'u32[]', space=smem, size = 0x4, offset = 0x4, fixed_abs, tag = 'smem constant byte address 0x4 - core index']
  #allocation1 [shape = 'u32[144,128]{1,0:T(1,128)}', space=vmem, size = 0x12000, scoped, tag = 'internal scratch']
  #allocation2 [shape = 'f32[16,16]{1,0:T(8,128)}', space=vmem, size = 0x2000, scoped, tag = 'scratch operand']
  %s0 = inlined_call_operand.hbm [shape: f32[2,9,16,16], index: 0, kind: input, shape index: {}]
  %s1 = inlined_call_operand.hbm [shape: f32[2,24,128], index: 1, kind: input, shape index: {}]
  %s2 = inlined_call_operand.hbm [shape: f32[2,16,16], index: 2, kind: input, shape index: {}]
  %s3 = inlined_call_operand.hbm [shape: f32[2,16,16], index: 3, kind: output, shape index: {}]
  %s4 = sld [smem:[#allocation0]]
  $region69: #{tpu_custom_call.1} parent=0
    _
  %s6 = ssub.s32 1, %s4
  %s7 = scalar_select 0, %s6, %s4
  $region1: #{tpu_custom_call.1} parent=0
    #allocation3 [shape = 'u8[49152]{0}', space=vmem, size = 0xc000, scoped, tag = 'input window, operand 0']
    #allocation4 [shape = 's32[2]{0}', space=sflag, size = 0x8, scoped, tag = 'scoped memory for tpu_custom_call.1']
    #allocation5 [shape = 's32[2]{0}', space=sflag, size = 0x8, scoped, tag = 'scoped memory for tpu_custom_call.1']
    #allocation6 [shape = 'u8[24576]{0}', space=vmem, size = 0x6000, scoped, tag = 'input window, operand 1']
    #allocation7 [shape = 's32[2]{0}', space=sflag, size = 0x8, scoped, tag = 'scoped memory for tpu_custom_call.1']
    #allocation8 [shape = 'u8[16384]{0}', space=vmem, size = 0x4000, scoped, tag = 'input window, operand 2']
    #allocation9 [shape = 'u8[16384]{0}', space=vmem, size = 0x4000, scoped, tag = 'output window, operand 0']
    %8 = vsyncpa [#allocation4], 0
    %s9 = scalar_lea.sflag [#allocation4], 1
    %10 = vsyncpa %s9, 0
    %11 = vsyncpa [#allocation7], 0
    %s12 = scalar_lea.sflag [#allocation7], 1
    %13 = vsyncpa %s12, 0
    %14 = vsyncpa [#allocation5], 0
    %s15 = scalar_lea.sflag [#allocation5], 1
    %16 = vsyncpa %s15, 0
    loop: start=0, step=1, limit=8
    $region2: #{tpu_custom_call.1} parent=1 // loop_pre_header
      _
    $region3: #{tpu_custom_call.1} parent=1 // loop_header
      %s18 = sphi 0, %s22
      %p19 = scmp.ge.s32.totalorder %s18, 8
      %s25 = sphi 0, %s44
      %s26 = sphi 0, %s40
      %s27 = sphi 0, %s36
      %s28 = sphi 0, %s25
      %s29 = sphi 0, %s26
      %s30 = sphi 0, %s27
      %s31 = sphi 0, %s28
      %s32 = sphi 0, %s29
      %s33 = sphi 0, %s30
      %s51 = sphi 0, %s53
      %s54 = sphi 0, %s51
      %s55 = sphi 0, %s54
      %s71 = sphi 0, %s55
      %s77 = sphi 0, %s79
      %s80 = sphi 0, %s77
      %s81 = sphi 0, %s80
      %s97 = sphi 0, %s81
      %s105 = sphi 0, %s107
      %s108 = sphi 0, %s105
      %s109 = sphi 0, %s108
      %s125 = sphi 0, %s109
      %s133 = sphi 0, %s135
      %s136 = sphi 0, %s133
      %s137 = sphi 0, %s136
      %s153 = sphi 0, %s137
    $region4: #{tpu_custom_call.1} parent=1 // loop_header_branch
      %21 = sbr.rel (%p19) target = $region8
    $region5: #{tpu_custom_call.1} parent=1 // loop_body
      %s23 = ssub.s32 %s18, 1
      %s24 = ssub.s32 %s18, 2
      %s34 = sadd.s32 1, %s27
      %p35 = scmp.ge.s32.totalorder %s34, 3
      %s36 = scalar_select %p35, 0, %s34
      %s37 = sadd.s32 1, %s26
      %s38 = scalar_select %p35, %s37, %s26
      %p39 = scmp.ge.s32.totalorder %s38, 1
      %s40 = scalar_select %p39, 0, %s38
      %s41 = sadd.s32 1, %s25
      %s42 = scalar_select %p39, %s41, %s25
      %p43 = scmp.ge.s32.totalorder %s42, 2
      %s44 = scalar_select %p43, 0, %s42
      %s45 = ssub.s32 %s25, %s44
      %s46 = ssub.s32 %s27, %s36
      %s47 = sor.u32 %s45, %s46
      %s48 = ssub.s32 %s26, %s40
      %s49 = sor.u32 %s47, %s48
      %p50 = scmp.eq.s32.totalorder %s49, 0
      %s52 = sadd.s32 %s51, 1
      %s53 = scalar_select %p50, %s51, %s52
      %p56 = pneg %p50
      %p57 = scmp.eq.s32.totalorder %s18, 5
      %p58 = por %p56, %p57
      %p59 = scmp.ne.s32.totalorder %s51, %s54
      %p60 = scmp.eq.s32.totalorder %s18, 0
      %p61 = por %p59, %p60
      %p62 = scmp.ne.s32.totalorder %s51, %s54
      %p63 = scmp.eq.s32.totalorder %s23, 5
      %p64 = por %p62, %p63
      %p65 = scmp.ne.s32.totalorder %s54, %s55
      %p66 = scmp.eq.s32.totalorder %s23, 0
      %p67 = por %p65, %p66
      %p68 = scmp.ne.s32.totalorder %s54, %s55
      %p69 = scmp.eq.s32.totalorder %s24, 5
      %p70 = por %p68, %p69
      %p72 = scmp.ne.s32.totalorder %s55, %s71
      %p73 = scmp.eq.s32.totalorder %s24, 0
      %p74 = por %p72, %p73
      %s75 = ssub.s32 %s25, %s44
      %p76 = scmp.eq.s32.totalorder %s75, 0
      %s78 = sadd.s32 %s77, 1
      %s79 = scalar_select %p76, %s77, %s78
      %p82 = pneg %p76
      %p83 = scmp.eq.s32.totalorder %s18, 5
      %p84 = por %p82, %p83
      %p85 = scmp.ne.s32.totalorder %s77, %s80
      %p86 = scmp.eq.s32.totalorder %s18, 0
      %p87 = por %p85, %p86
      %p88 = scmp.ne.s32.totalorder %s77, %s80
      %p89 = scmp.eq.s32.totalorder %s23, 5
      %p90 = por %p88, %p89
      %p91 = scmp.ne.s32.totalorder %s80, %s81
      %p92 = scmp.eq.s32.totalorder %s23, 0
      %p93 = por %p91, %p92
      %p94 = scmp.ne.s32.totalorder %s80, %s81
      %p95 = scmp.eq.s32.totalorder %s24, 5
      %p96 = por %p94, %p95
      %p98 = scmp.ne.s32.totalorder %s81, %s97
      %p99 = scmp.eq.s32.totalorder %s24, 0
      %p100 = por %p98, %p99
      %s101 = ssub.s32 %s25, %s44
      %s102 = ssub.s32 %s26, %s40
      %s103 = sor.u32 %s101, %s102
      %p104 = scmp.eq.s32.totalorder %s103, 0
      %s106 = sadd.s32 %s105, 1
      %s107 = scalar_select %p104, %s105, %s106
      %p110 = pneg %p104
      %p111 = scmp.eq.s32.totalorder %s18, 5
      %p112 = por %p110, %p111
      %p113 = scmp.ne.s32.totalorder %s105, %s108
      %p114 = scmp.eq.s32.totalorder %s18, 0
      %p115 = por %p113, %p114
      %p116 = scmp.ne.s32.totalorder %s105, %s108
      %p117 = scmp.eq.s32.totalorder %s23, 5
      %p118 = por %p116, %p117
      %p119 = scmp.ne.s32.totalorder %s108, %s109
      %p120 = scmp.eq.s32.totalorder %s23, 0
      %p121 = por %p119, %p120
      %p122 = scmp.ne.s32.totalorder %s108, %s109
      %p123 = scmp.eq.s32.totalorder %s24, 5
      %p124 = por %p122, %p123
      %p126 = scmp.ne.s32.totalorder %s109, %s125
      %p127 = scmp.eq.s32.totalorder %s24, 0
      %p128 = por %p126, %p127
      %s129 = ssub.s32 %s25, %s44
      %s130 = ssub.s32 %s26, %s40
      %s131 = sor.u32 %s129, %s130
      %p132 = scmp.eq.s32.totalorder %s131, 0
      %s134 = sadd.s32 %s133, 1
      %s135 = scalar_select %p132, %s133, %s134
      %p138 = pneg %p132
      %p139 = scmp.eq.s32.totalorder %s18, 5
      %p140 = por %p138, %p139
      %p141 = scmp.ne.s32.totalorder %s133, %s136
      %p142 = scmp.eq.s32.totalorder %s18, 0
      %p143 = por %p141, %p142
      %p144 = scmp.ne.s32.totalorder %s133, %s136
      %p145 = scmp.eq.s32.totalorder %s23, 5
      %p146 = por %p144, %p145
      %p147 = scmp.ne.s32.totalorder %s136, %s137
      %p148 = scmp.eq.s32.totalorder %s23, 0
      %p149 = por %p147, %p148
      %p150 = scmp.ne.s32.totalorder %s136, %s137
      %p151 = scmp.eq.s32.totalorder %s24, 5
      %p152 = por %p150, %p151
      %p154 = scmp.ne.s32.totalorder %s137, %s153
      %p155 = scmp.eq.s32.totalorder %s24, 0
      %p156 = por %p154, %p155
      %p157 = scmp.le.s32.totalorder 1, %s18
      %p158 = scmp.lt.s32.totalorder %s18, 7
      %p159 = pnand %p157, %p158
      %p160 = pneg %p159
      // Predicated region
      $region9: #{tpu_custom_call.1} parent=5 // pred_check
        _
      $region10: #{tpu_custom_call.1} parent=5 // pred_check_branch
        %162 = sbr.rel (%p159) target = $region12
      $region11: #{tpu_custom_call.1} parent=5 // pred_region
        %s163 = ssub.s32 %s18, 1
      $region12: #{tpu_custom_call.1} parent=5 // pred_fallthru
        _
      %p164 = scmp.lt.s32.totalorder %s18, 6
      // Predicated region
      $region13: #{tpu_custom_call.1} parent=5 // pred_check
        %p165 = pneg %p164
      $region14: #{tpu_custom_call.1} parent=5 // pred_check_branch
        %167 = sbr.rel (%p165) target = $region16
      $region15: #{tpu_custom_call.1} parent=5 // pred_region
        // Predicated region
        $region17: #{tpu_custom_call.1} parent=15 // pred_check
          %p168 = pneg %p61
        $region18: #{tpu_custom_call.1} parent=15 // pred_check_branch
          %170 = sbr.rel (%p168) target = $region20
        $region19: #{tpu_custom_call.1} parent=15 // pred_region
          %s171 = sand.u32 %s51, 1
          %s172 = scalar_lea.sflag [#allocation4], %s171
          %s173 = sand.u32 %s51, 1
          %s174 = smul.addr %s173, 48
          %s175 = scalar_lea.vmem [#allocation3], %s174
          %s176 = smul.u32 3, %s27
          %s177 = smul.u32 2, %s26
          %s179 = ssub.s32 768, 768
          %180 = vsyncadd %s172, %s179
          %s181 = smul.addr %s176, 2
          %s182 = sadd.s32 %s177, %s181
          %s183 = smul.addr %s25, 18
          %s184 = sadd.s32 %s182, %s183
          %s185 = smul.addr %s184, 128
          %s186 = scalar_lea.hbm %s0, %s185
          %s187 = sshll.u32 %s175, 4
          %s188 = int_to_ptr.vmem [resolvable:$true] %s187
          %193 = dma.hbm_to_vmem [thread:$0]  %s186, 768, %s188, %s172, 128, 128, 8
        $region20: #{tpu_custom_call.1} parent=15 // pred_fallthru
          _
        // Predicated region
        $region21: #{tpu_custom_call.1} parent=15 // pred_check
          %p194 = pneg %p87
        $region22: #{tpu_custom_call.1} parent=15 // pred_check_branch
          %196 = sbr.rel (%p194) target = $region24
        $region23: #{tpu_custom_call.1} parent=15 // pred_region
          %s197 = sand.u32 %s18, 1
          %s198 = scalar_lea.sflag [#allocation7], %s197
          %s199 = sand.u32 %s77, 1
          %s200 = smul.addr %s199, 24
          %s201 = scalar_lea.vmem [#allocation6], %s200
          %s203 = ssub.s32 384, 384
          %204 = vsyncadd %s198, %s203
          %s205 = smul.addr %s25, 3
          %s206 = smul.addr %s205, 128
          %s207 = scalar_lea.hbm %s1, %s206
          %s208 = sshll.u32 %s201, 4
          %s209 = int_to_ptr.vmem [resolvable:$true] %s208
          %214 = dma.hbm_to_vmem [thread:$0]  %s207, 384, %s209, %s198, 128, 128, 8
        $region24: #{tpu_custom_call.1} parent=15 // pred_fallthru
          _
        // Predicated region
        $region25: #{tpu_custom_call.1} parent=15 // pred_check
          %p215 = pneg %p115
        $region26: #{tpu_custom_call.1} parent=15 // pred_check_branch
          %217 = sbr.rel (%p215) target = $region28
        $region27: #{tpu_custom_call.1} parent=15 // pred_region
          %s218 = sand.u32 %s18, 1
          %s219 = scalar_lea.sflag [#allocation7], %s218
          %s220 = sand.u32 %s105, 1
          %s221 = smul.addr %s220, 16
          %s222 = scalar_lea.vmem [#allocation8], %s221
          %s223 = smul.u32 2, %s26
          %s225 = ssub.s32 256, 256
          %226 = vsyncadd %s219, %s225
          %s227 = smul.addr %s25, 2
          %s228 = sadd.s32 %s223, %s227
          %s229 = smul.addr %s228, 128
          %s230 = scalar_lea.hbm %s2, %s229
          %s231 = sshll.u32 %s222, 4
          %s232 = int_to_ptr.vmem [resolvable:$true] %s231
          %237 = dma.hbm_to_vmem [thread:$0]  %s230, 256, %s232, %s219, 128, 128, 8
        $region28: #{tpu_custom_call.1} parent=15 // pred_fallthru
          _
      $region16: #{tpu_custom_call.1} parent=5 // pred_fallthru
        _
      %p238 = scmp.le.s32.totalorder 1, %s18
      %p239 = scmp.lt.s32.totalorder %s18, 7
      %p240 = pnand %p238, %p239
      %p241 = pneg %p240
      // Predicated region
      $region29: #{tpu_custom_call.1} parent=5 // pred_check
        _
      $region30: #{tpu_custom_call.1} parent=5 // pred_check_branch
        %243 = sbr.rel (%p240) target = $region32
      $region31: #{tpu_custom_call.1} parent=5 // pred_region
        %s244 = ssub.s32 %s18, 1
        %s245 = sand.u32 %s54, 1
        %s246 = scalar_lea.sflag [#allocation4], %s245
        %s247 = sand.u32 %s54, 1
        %s248 = smul.addr %s247, 48
        %s249 = scalar_lea.vmem [#allocation3], %s248
        // Predicated region
        $region33: #{tpu_custom_call.1} parent=31 // pred_check
          %p250 = pneg %p67
        $region34: #{tpu_custom_call.1} parent=31 // pred_check_branch
          %252 = sbr.rel (%p250) target = $region36
        $region35: #{tpu_custom_call.1} parent=31 // pred_region
          %253 = dma.done %s246, 768
        $region36: #{tpu_custom_call.1} parent=31 // pred_fallthru
          _
        %s254 = sand.u32 %s23, 1
        %s255 = scalar_lea.sflag [#allocation7], %s254
        %s256 = sand.u32 %s80, 1
        %s257 = smul.addr %s256, 24
        %s258 = scalar_lea.vmem [#allocation6], %s257
        // Predicated region
        $region37: #{tpu_custom_call.1} parent=31 // pred_check
          %p259 = pneg %p93
        $region38: #{tpu_custom_call.1} parent=31 // pred_check_branch
          %261 = sbr.rel (%p259) target = $region40
        $region39: #{tpu_custom_call.1} parent=31 // pred_region
          %262 = dma.done %s255, 384
        $region40: #{tpu_custom_call.1} parent=31 // pred_fallthru
          _
        %s263 = sand.u32 %s23, 1
        %s264 = scalar_lea.sflag [#allocation7], %s263
        %s265 = sand.u32 %s108, 1
        %s266 = smul.addr %s265, 16
        %s267 = scalar_lea.vmem [#allocation8], %s266
        // Predicated region
        $region41: #{tpu_custom_call.1} parent=31 // pred_check
          %p268 = pneg %p121
        $region42: #{tpu_custom_call.1} parent=31 // pred_check_branch
          %270 = sbr.rel (%p268) target = $region44
        $region43: #{tpu_custom_call.1} parent=31 // pred_region
          %271 = dma.done %s264, 256
        $region44: #{tpu_custom_call.1} parent=31 // pred_fallthru
          _
        %s272 = sand.u32 %s54, 1
        %s273 = scalar_lea.sflag [#allocation4], %s272
        %s274 = sand.u32 %s54, 1
        %s275 = smul.addr %s274, 48
        %s276 = scalar_lea.vmem [#allocation3], %s275
        %p277 = pneg %p67
        %p278 = pneg %p64
        %s279 = sand.u32 %s23, 1
        %s280 = scalar_lea.sflag [#allocation7], %s279
        %s281 = sand.u32 %s80, 1
        %s282 = smul.addr %s281, 24
        %s283 = scalar_lea.vmem [#allocation6], %s282
        %p284 = pneg %p93
        %p285 = pneg %p90
        %s286 = sand.u32 %s23, 1
        %s287 = scalar_lea.sflag [#allocation7], %s286
        %s288 = sand.u32 %s108, 1
        %s289 = smul.addr %s288, 16
        %s290 = scalar_lea.vmem [#allocation8], %s289
        %p291 = pneg %p121
        %p292 = pneg %p118
        %p293 = pneg %p149
        %p294 = pneg %p146
        %s295 = sand.u32 %s136, 1
        %s296 = scalar_lea.sflag [#allocation5], %s295
        %s297 = sand.u32 %s136, 1
        %s298 = smul.addr %s297, 16
        %s299 = scalar_lea.vmem [#allocation9], %s298
        %s300 = smul.u32 3, %s30
        %s301 = smul.u32 2, %s29
        %s302 = smul.u32 2, %s29
        %s303 = smul.u32 2, %s29
        %p304 = scmp.eq.s32.totalorder %s30, 0
        // Predicated region
        $region45: #{tpu_custom_call.1} parent=31 // pred_check
          %p305 = pneg %p304
        $region46: #{tpu_custom_call.1} parent=31 // pred_check_branch
          %307 = sbr.rel (%p305) target = $region48
        $region47: #{tpu_custom_call.1} parent=31 // pred_region
          %vm308 = vcmask 130048
          %309 = vst.msk [vmem:[#allocation2] sm:$0xff] %vm308, 0.0
          %310 = vst.msk [vmem:[#allocation2 + $0x8] sm:$0xff] %vm308, 0.0
        $region48: #{tpu_custom_call.1} parent=31 // pred_fallthru
          _
        %s311 = smul.u32 %s29, 16
        %s312 = sadd.s32 %s311, %s30
        %s313 = scalar_lea.vmem %s258, %s312 [#allocation6]
        %v314 = vld [vmem:[%s313] sm:$0xff]
        %v315 = vld [vmem:[%s313 + $0x8] sm:$0xff]
        %v316 = vld [vmem:[#allocation2] sm:$0xff]
        %v317 = vld [vmem:[#allocation2 + $0x8] sm:$0xff]
        %v318 = vld [vmem:[%s249] sm:$0xff]
        %v319 = vld [vmem:[%s249 + $0x8] sm:$0xff]
        %v320 = vmul.f32 %v318, %v314
        %v321 = vmul.f32 %v319, %v315
        %v322 = vadd.f32 %v316, %v320
        %v323 = vadd.f32 %v317, %v321
        %s324 = scalar_lea.vmem %s249, 16 [#allocation3]
        %v325 = vld [vmem:[%s324] sm:$0xff]
        %v326 = vld [vmem:[%s324 + $0x8] sm:$0xff]
        %p327 = scmp.eq.s32.totalorder %s30, 1
        %v328 = vld [vmem:[%s267] sm:$0xff]
        %v329 = vld [vmem:[%s267 + $0x8] sm:$0xff]
        %s330 = scalar_select %p327, 1, 0
        %v331 = vstv %s330
        %vm332 = vcmp.eq.s32.totalorder %v331, 1
        %335 = vrot.lane.b32.xlu0 %v314, 127
        %v336 = vpop.permute.xlu0 %335
        %337 = vrot.lane.b32.xlu0 %v315, 127
        %v338 = vpop.permute.xlu0 %337
        %v341 = vsel %vm332, %v328, %v336
        %v342 = vsel %vm332, %v329, %v338
        %v343 = vmul.f32 %v325, %v341
        %v344 = vmul.f32 %v326, %v342
        %v345 = vadd.f32 %v322, %v343
        %v346 = vadd.f32 %v323, %v344
        %s347 = scalar_lea.vmem %s249, 32 [#allocation3]
        %v348 = vld [vmem:[%s347] sm:$0xff]
        %v349 = vld [vmem:[%s347 + $0x8] sm:$0xff]
        %350 = vrot.lane.b32.xlu0 %v314, 126
        %v351 = vpop.permute.xlu0 %350
        %352 = vrot.lane.b32.xlu0 %v315, 126
        %v353 = vpop.permute.xlu0 %352
        %v356 = vmul.f32 %v348, %v351
        %v357 = vmul.f32 %v349, %v353
        %v358 = vadd.f32 %v345, %v356
        %v359 = vadd.f32 %v346, %v357
        %p360 = scmp.ne.s32.totalorder %s30, 2
        // Predicated region
        $region49: #{tpu_custom_call.1} parent=31 // pred_check
          %p361 = pneg %p360
        $region50: #{tpu_custom_call.1} parent=31 // pred_check_branch
          %363 = sbr.rel (%p361) target = $region52
        $region51: #{tpu_custom_call.1} parent=31 // pred_region
          %vm364 = vcmask 130048
          %365 = vst.msk [vmem:[#allocation2] sm:$0xff] %vm364, %v358
          %366 = vst.msk [vmem:[#allocation2 + $0x8] sm:$0xff] %vm364, %v359
        $region52: #{tpu_custom_call.1} parent=31 // pred_fallthru
          _
        %p367 = scmp.eq.s32.totalorder %s30, 2
        // Predicated region
        $region53: #{tpu_custom_call.1} parent=31 // pred_check
          %p368 = pneg %p367
        $region54: #{tpu_custom_call.1} parent=31 // pred_check_branch
          %370 = sbr.rel (%p368) target = $region56
        $region55: #{tpu_custom_call.1} parent=31 // pred_region
          %vm371 = vcmask 130048
          %372 = vst.msk [vmem:[%s299] sm:$0xff] %vm371, %v358
          %373 = vst.msk [vmem:[%s299 + $0x8] sm:$0xff] %vm371, %v359
        $region56: #{tpu_custom_call.1} parent=31 // pred_fallthru
          _
        %s374 = sand.u32 %s136, 1
        %s375 = scalar_lea.sflag [#allocation5], %s374
        %s376 = sand.u32 %s136, 1
        %s377 = smul.addr %s376, 16
        %s378 = scalar_lea.vmem [#allocation9], %s377
        // Predicated region
        $region57: #{tpu_custom_call.1} parent=31 // pred_check
          %p379 = pneg %p146
        $region58: #{tpu_custom_call.1} parent=31 // pred_check_branch
          %381 = sbr.rel (%p379) target = $region60
        $region59: #{tpu_custom_call.1} parent=31 // pred_region
          %s382 = smul.u32 2, %s29
          %s384 = ssub.s32 256, 256
          %385 = vsyncadd %s375, %s384
          %s386 = smul.addr %s28, 2
          %s387 = sadd.s32 %s382, %s386
          %s388 = smul.addr %s387, 128
          %s389 = scalar_lea.hbm %s3, %s388
          %s390 = sshll.u32 %s378, 4
          %s391 = int_to_ptr.vmem [resolvable:$true] %s390
          %396 = dma.vmem_to_hbm [thread:$0]  %s391, 256, %s389, %s375, 128, 128, 8
        $region60: #{tpu_custom_call.1} parent=31 // pred_fallthru
          _
      $region32: #{tpu_custom_call.1} parent=5 // pred_fallthru
        _
      %p397 = scmp.le.s32.totalorder 2, %s18
      // Predicated region
      $region61: #{tpu_custom_call.1} parent=5 // pred_check
        %p398 = pneg %p397
      $region62: #{tpu_custom_call.1} parent=5 // pred_check_branch
        %400 = sbr.rel (%p398) target = $region64
      $region63: #{tpu_custom_call.1} parent=5 // pred_region
        %s401 = ssub.s32 %s18, 2
        // Predicated region
        $region65: #{tpu_custom_call.1} parent=63 // pred_check
          %p402 = pneg %p152
        $region66: #{tpu_custom_call.1} parent=63 // pred_check_branch
          %404 = sbr.rel (%p402) target = $region68
        $region67: #{tpu_custom_call.1} parent=63 // pred_region
          %s405 = sand.u32 %s137, 1
          %s406 = scalar_lea.sflag [#allocation5], %s405
          %s407 = sand.u32 %s137, 1
          %s408 = smul.addr %s407, 16
          %s409 = scalar_lea.vmem [#allocation9], %s408
          %410 = dma.done %s406, 256
        $region68: #{tpu_custom_call.1} parent=63 // pred_fallthru
          _
      $region64: #{tpu_custom_call.1} parent=5 // pred_fallthru
        _
    $region6: #{tpu_custom_call.1} parent=1 // loop_footer
      %s22 = sadd.s32 1, %s18
    $region7: #{tpu_custom_call.1} parent=1 // loop_footer_branch
      %17 = sbr.rel target = $region3
    $region8: #{tpu_custom_call.1} parent=1 // loop_exit
      _
    %411 = vsyncpa [#allocation4], 1
    %s412 = scalar_lea.sflag [#allocation4], 1
    %413 = vsyncpa %s412, 1
    %414 = vsyncpa [#allocation7], 1
    %s415 = scalar_lea.sflag [#allocation7], 1
    %416 = vsyncpa %s415, 1
    %417 = vsyncpa [#allocation5], 1
    %s418 = scalar_lea.sflag [#allocation5], 1
    %419 = vsyncpa %s418, 1

</llo_original>
